<compile_context>
chip_gen: v6e
topology: v6e:2x2x1
jax: 0.10.0
libtpu: 0.0.40
codegen_flags: <defaults>
</compile_context>

<pallas_src>
import functools

import jax
import jax.numpy as jnp
import numpy as np
from jax.experimental import pallas as pl
from jax.experimental.pallas import tpu as pltpu

_NEG = -1e30  # "minus infinity" for padded lanes (finite -> no inf*0 NaNs)


# ------------------------------ device helpers ----------------------------- #

def _round_up(x, m):
    return ((x + m - 1) // m) * m


def _is_v7():
    try:
        kind = jax.devices()[0].device_kind.lower()
    except Exception:
        return False
    return ("v7" in kind) or ("tpu7" in kind) or ("7x" in kind)


def _vmem_limit_bytes():
    # v7x: 64 MiB physical VMEM per TC -> stay well under; v5e/v6e: 128 MiB.
    return (48 if _is_v7() else 96) * 1024 * 1024


def _pick_tile_rows(n, f_pad, in_itemsize, num_outputs):
    """Largest row tile whose double-buffered working set fits a VMEM budget."""
    budget = (16 if _is_v7() else 32) * 1024 * 1024
    # 2x = BlockSpec double buffering of the input tile and each f32 output.
    per_row = 2 * f_pad * (in_itemsize + 4 * num_outputs)
    tile = budget // max(per_row, 1)
    tile = int(max(8, min(1024, (tile // 8) * 8)))
    return min(tile, _round_up(n, 8))


# ----------------------------- Pallas kernels ------------------------------ #
# Refs per grid step:
#   x_ref   : (TILE_N, F_pad)  logits tile (native dtype, cast in-kernel)
#   lab_ref : (TILE_N, 1)      int32 coarse labels
#   f2c_ref : (1, F_pad)       int32 fine->coarse map, -1 on padded lanes

def _mask_and_valid(x_ref, lab_ref, f2c_ref):
    x = x_ref[...].astype(jnp.float32)
    f2c = f2c_ref[...]                                   # (1, F)
    valid = f2c >= 0                                     # (1, F) real lanes
    mask = (lab_ref[...] == f2c).astype(jnp.float32)     # (TILE_N, F), VPU compare
    return x, mask, valid


def _masked_softmax_kernel(x_ref, lab_ref, f2c_ref, p_ref):
    x, mask, valid = _mask_and_valid(x_ref, lab_ref, f2c_ref)
    # Row-max subtraction is mathematically exact for the softmax ratio and
    # makes the kernel safe on raw (non max-subtracted) logits.
    xv = jnp.where(valid, x, _NEG)
    m = jnp.max(xv, axis=-1, keepdims=True)
    num = jnp.exp(xv - m) * mask
    denom = jnp.sum(num, axis=-1, keepdims=True)
    inv = pl.reciprocal(denom, approx=True)
    inv = inv * (2.0 - denom * inv)                      # one Newton step
    p_ref[...] = (num * inv).astype(p_ref.dtype)


def _masked_log_softmax_kernel(x_ref, lab_ref, f2c_ref, lp_ref, *, eps):
    x, mask, valid = _mask_and_valid(x_ref, lab_ref, f2c_ref)
    # Literal PyTorch formula (caller max-subtracts via calc_outputs) so the
    # epsilon semantics match exactly.
    exps = jnp.exp(x)
    masked = exps * mask + eps
    ssum = jnp.sum(jnp.where(valid, masked, 0.0), axis=-1, keepdims=True)
    lp_ref[...] = (jnp.log(masked) - jnp.log(ssum)).astype(lp_ref.dtype)


def _masked_softmax_and_log_softmax_kernel(x_ref, lab_ref, f2c_ref,
                                           p_ref, lp_ref, *, eps):
    x, mask, valid = _mask_and_valid(x_ref, lab_ref, f2c_ref)
    xv = jnp.where(valid, x, _NEG)
    m = jnp.max(xv, axis=-1, keepdims=True)
    e = jnp.exp(xv - m)                                  # single exp for both paths
    num = e * mask
    denom = jnp.sum(num, axis=-1, keepdims=True)
    inv = pl.reciprocal(denom, approx=True)
    inv = inv * (2.0 - denom * inv)
    p_ref[...] = (num * inv).astype(p_ref.dtype)
    # log path: exp(x) = exp(x - m) * exp(m) (per-row scalar rescale)
    masked = e * jnp.exp(m) * mask + eps
    ssum = jnp.sum(jnp.where(valid, masked, 0.0), axis=-1, keepdims=True)
    lp_ref[...] = (jnp.log(masked) - jnp.log(ssum)).astype(lp_ref.dtype)


# ------------------------------- dispatcher -------------------------------- #

def _run_masked_kernel(kernel, num_outputs, outputs, coarse_labels, fine_to_coarse):
    n, f = outputs.shape
    f_pad = _round_up(max(f, 128), 128)                  # lane-dense last dim
    in_itemsize = jnp.dtype(outputs.dtype).itemsize
    tile = _pick_tile_rows(n, f_pad, in_itemsize, num_outputs)
    n_pad = _round_up(n, tile)

    x = outputs
    if (n_pad != n) or (f_pad != f):
        x = jnp.pad(x, ((0, n_pad - n), (0, f_pad - f)))

    lab = coarse_labels.astype(jnp.int32).reshape(n, 1)
    if n_pad != n:
        lab = jnp.pad(lab, ((0, n_pad - n), (0, 0)))

    f2c = fine_to_coarse.astype(jnp.int32)
    if f_pad != f:
        f2c = jnp.pad(f2c, (0, f_pad - f), constant_values=-1)
    f2c = f2c.reshape(1, f_pad)

    grid = (n_pad // tile,)
    x_spec = pl.BlockSpec((tile, f_pad), lambda i: (i, 0))
    lab_spec = pl.BlockSpec((tile, 1), lambda i: (i, 0))
    f2c_spec = pl.BlockSpec((1, f_pad), lambda i: (0, 0))
    out_spec = pl.BlockSpec((tile, f_pad), lambda i: (i, 0))
    out_shape = jax.ShapeDtypeStruct((n_pad, f_pad), jnp.float32)

    if num_outputs == 1:
        out_shapes, out_specs = out_shape, out_spec
    else:
        out_shapes = (out_shape,) * num_outputs
        out_specs = (out_spec,) * num_outputs

    res = pl.pallas_call(
        kernel,
        grid=grid,
        in_specs=[x_spec, lab_spec, f2c_spec],
        out_specs=out_specs,
        out_shape=out_shapes,
        compiler_params=pltpu.CompilerParams(
            dimension_semantics=("parallel",),
            vmem_limit_bytes=_vmem_limit_bytes(),
        ),
    )(x, lab, f2c)

    if num_outputs == 1:
        return res[:n, :f]
    return tuple(r[:n, :f] for r in res)


# ------------------------------- Module port -------------------------------- #

class SSLObjective:
    """JAX/Pallas port of the PyTorch SSLObjective compute helpers."""

    def __init__(self, hierarchical_ssl=None, edge_matrix=None, coarse_tp=0, fine_tp=1):
        self.hierarchical_ssl = hierarchical_ssl
        self.coarse_tp = coarse_tp
        self.fine_tp = fine_tp
        self.edge_matrix = jnp.asarray(edge_matrix, dtype=jnp.float32)   # (F, C)
        # torch.nonzero(edge_matrix == 1.0)[1] with exactly one 1 per row:
        self.fine_to_coarse = jnp.argmax(self.edge_matrix, axis=1).astype(jnp.int32)
        assert self.fine_to_coarse.shape[0] == self.edge_matrix.shape[0]
        # (mask gather is done in-kernel via label == fine_to_coarse compare,
        # which assumes exactly one parent coarse class per fine class.)

    # ---- Pallas-backed hot paths ----
    def masked_softmax(self, outputs, coarse_labels):
        assert outputs.shape[0] == coarse_labels.shape[0]
        return _run_masked_kernel(_masked_softmax_kernel, 1,
                                  outputs, coarse_labels, self.fine_to_coarse)

    def masked_log_softmax(self, outputs, coarse_labels, epsilon=1e-20):
        assert outputs.shape[0] == coarse_labels.shape[0]
        kernel = functools.partial(_masked_log_softmax_kernel, eps=float(epsilon))
        return _run_masked_kernel(kernel, 1,
                                  outputs, coarse_labels, self.fine_to_coarse)

    def masked_softmax_and_log_softmax(self, outputs, coarse_labels, epsilon=1e-20):
        """Fused: one HBM read of `outputs`, one exp/mask pass, two outputs."""
        assert outputs.shape[0] == coarse_labels.shape[0]
        kernel = functools.partial(_masked_softmax_and_log_softmax_kernel,
                                   eps=float(epsilon))
        return _run_masked_kernel(kernel, 2,
                                  outputs, coarse_labels, self.fine_to_coarse)

    # ---- glue helpers (plain JAX) ----
    def condition_outputs_for_probs(self, outputs, labels):
        if self.hierarchical_ssl in ['conditioning', 'filtering_conditioning']:
            return self.masked_softmax(outputs, labels[0])
        elif self.hierarchical_ssl in [None, 'filtering']:
            return jax.nn.softmax(outputs, axis=1)
        raise NotImplementedError()

    def condition_outputs_for_log_probs(self, outputs, labels):
        if self.hierarchical_ssl in ['conditioning', 'filtering_conditioning']:
            return self.masked_log_softmax(outputs, labels[0])
        elif self.hierarchical_ssl in [None, 'filtering']:
            return jax.nn.log_softmax(outputs, axis=1)
        raise NotImplementedError()

    def condition_outputs_for_probs_and_log_probs(self, outputs, labels):
        """Fused variant when both probs and log-probs of the same outputs are needed."""
        if self.hierarchical_ssl in ['conditioning', 'filtering_conditioning']:
            return self.masked_softmax_and_log_softmax(outputs, labels[0])
        elif self.hierarchical_ssl in [None, 'filtering']:
            return (jax.nn.softmax(outputs, axis=1),
                    jax.nn.log_softmax(outputs, axis=1))
        raise NotImplementedError()

    def calc_filter_mask(self, probs, labels):
        if self.hierarchical_ssl in ['filtering', 'filtering_conditioning']:
            pred = jnp.argmax(probs, axis=1)
            pred_labels = jnp.take(self.fine_to_coarse, pred)
            gt_labels = labels[0]
            return pred_labels == gt_labels
        elif self.hierarchical_ssl in [None, 'conditioning']:
            return labels[0] == labels[0]
        raise NotImplementedError()

    def calc_outputs_from_logits(self, logits):
        # mirrors calc_outputs(): subtract per-row max from model outputs.
        # (masked_softmax re-does a max-subtract in-kernel — exact — so it is
        # also safe on raw logits.)
        return logits - jnp.max(logits, axis=1, keepdims=True)

    def calc_outputs(self, model, inputs):
        return self.calc_outputs_from_logits(model(inputs))

    def calc_labels(self, model, inputs):
        return jnp.argmax(self.calc_outputs(model, inputs), axis=1)

    def calc_conditioned_labels(self, model, inputs, labels):
        outputs = self.calc_outputs(model, inputs)
        conditioned_probs = self.condition_outputs_for_probs(outputs, labels)
        return jnp.argmax(conditioned_probs, axis=1)

    def calc_ssl_stats(self, probs, labels):
        max_probs = jnp.max(probs, axis=1)
        pred = jnp.argmax(probs, axis=1)
        pred_labels = jnp.stack([
            jnp.take(self.fine_to_coarse, pred).astype(jnp.float32),
            pred.astype(jnp.float32)])
        gt_labels = jnp.stack([
            jnp.asarray(labels[self.coarse_tp]).astype(jnp.float32),
            jnp.asarray(labels[self.fine_tp]).astype(jnp.float32)])
        return {'max_probs': max_probs[None, :],
                'pred_labels': pred_labels,
                'gt_labels': gt_labels}

    def put_on_device(self, labels, device=None):
        # JAX manages device placement; identity for API compatibility.
        return list(labels)

    def forward(self, model, inputs, labels):
        raise NotImplementedError()


# ------------------------------ reference check ----------------------------- #

def _ref_masked_softmax(outputs, coarse_labels, edge_matrix):
    mask = edge_matrix.T[coarse_labels]
    exps = np.exp(outputs)
    masked = exps * mask
    return masked / masked.sum(1, keepdims=True)


def _ref_masked_log_softmax(outputs, coarse_labels, edge_matrix, eps=1e-20):
    mask = edge_matrix.T[coarse_labels]
    exps = np.exp(outputs)
    masked = exps * mask + eps
    return np.log(masked) - np.log(masked.sum(1, keepdims=True))


if __name__ == "__main__":
    key = jax.random.PRNGKey(0)
    k_logit, k_clab, k_flab = jax.random.split(key, 3)

    N, FINE, COARSE = 8, 16, 4

    # Deterministic edge matrix: fine class f belongs to coarse class f % COARSE.
    fine_to_coarse_np = np.arange(FINE) % COARSE
    edge_np = np.zeros((FINE, COARSE), dtype=np.float32)
    edge_np[np.arange(FINE), fine_to_coarse_np] = 1.0
    edge_matrix = jnp.asarray(edge_np)

    ssl = SSLObjective(hierarchical_ssl='filtering_conditioning',
                       edge_matrix=edge_matrix)

    logits = jax.random.normal(k_logit, (N, FINE), dtype=jnp.float32)
    outputs = ssl.calc_outputs_from_logits(logits)
    coarse_labels = jax.random.randint(k_clab, (N,), 0, COARSE, dtype=jnp.int32)
    fine_labels = jax.random.randint(k_flab, (N,), 0, FINE, dtype=jnp.int32)
    labels = [coarse_labels, fine_labels]

    # standalone kernels
    probs = ssl.condition_outputs_for_probs(outputs, labels)
    log_probs = ssl.condition_outputs_for_log_probs(outputs, labels)
    # fused kernel (single HBM pass for both outputs)
    probs_f, log_probs_f = ssl.condition_outputs_for_probs_and_log_probs(outputs, labels)
    filt = ssl.calc_filter_mask(probs, labels)
    stats = ssl.calc_ssl_stats(probs, labels)

    probs, log_probs, probs_f, log_probs_f, filt = jax.block_until_ready(
        (probs, log_probs, probs_f, log_probs_f, filt))

    # numerical check against a NumPy reference of the PyTorch math
    out_np = np.asarray(outputs)
    lab_np = np.asarray(coarse_labels)
    ref_p = _ref_masked_softmax(out_np, lab_np, edge_np)
    ref_lp = _ref_masked_log_softmax(out_np, lab_np, edge_np)

    np.testing.assert_allclose(np.asarray(probs), ref_p, rtol=1e-5, atol=1e-5)
    np.testing.assert_allclose(np.asarray(log_probs), ref_lp, rtol=1e-4, atol=1e-4)
    np.testing.assert_allclose(np.asarray(probs_f), ref_p, rtol=1e-5, atol=1e-5)
    np.testing.assert_allclose(np.asarray(log_probs_f), ref_lp, rtol=1e-4, atol=1e-4)
    assert np.asarray(filt).shape == (N,)
    assert np.asarray(stats['pred_labels']).shape == (2, N)

    print("KERNEL_OK")
</pallas_src>

<mosaic_0001>
module attributes {stable_mosaic.version = 11 : i64} {
  func.func @_masked_softmax_kernel(%arg0: i32, %arg1: memref<8x128xf32, #tpu.memory_space<vmem>>, %arg2: memref<8x1xi32, #tpu.memory_space<vmem>>, %arg3: memref<1x128xi32, #tpu.memory_space<vmem>>, %arg4: memref<8x128xf32, #tpu.memory_space<vmem>>) attributes {dimension_semantics = [#tpu.dimension_semantics<parallel>], iteration_bounds = array<i64: 1>, scalar_prefetch = 0 : i64, scratch_operands = 0 : i64, tpu.core_type = #tpu.core_type<tc>, window_params = [{transform_indices = @transform_0, window_bounds = array<i64: 8, 128>}, {transform_indices = @transform_1, window_bounds = array<i64: 8, 1>}, {pipeline_mode = #tpu.pipeline_mode<synchronous>, transform_indices = @transform_2, window_bounds = array<i64: 1, 128>}, {transform_indices = @transform_3, window_bounds = array<i64: 8, 128>}]} {
    %c0 = arith.constant 0 : index
    %c0_0 = arith.constant 0 : index
    %0 = vector.load %arg1[%c0, %c0_0] : memref<8x128xf32, #tpu.memory_space<vmem>>, vector<8x128xf32>
    %c0_1 = arith.constant 0 : index
    %c0_2 = arith.constant 0 : index
    %1 = vector.load %arg3[%c0_1, %c0_2] : memref<1x128xi32, #tpu.memory_space<vmem>>, vector<1x128xi32>
    %c0_i32 = arith.constant 0 : i32
    %2 = vector.broadcast %c0_i32 : i32 to vector<1x128xi32>
    %3 = arith.cmpi sge, %1, %2 : vector<1x128xi32>
    %c0_3 = arith.constant 0 : index
    %c0_4 = arith.constant 0 : index
    %4 = vector.load %arg2[%c0_3, %c0_4] : memref<8x1xi32, #tpu.memory_space<vmem>>, vector<8x1xi32>
    %5 = vector.broadcast %4 : vector<8x1xi32> to vector<8x128xi32>
    %6 = vector.broadcast %1 : vector<1x128xi32> to vector<8x128xi32>
    %7 = arith.cmpi eq, %5, %6 : vector<8x128xi32>
    %8 = arith.extui %7 : vector<8x128xi1> to vector<8x128xi32>
    %9 = arith.sitofp %8 : vector<8x128xi32> to vector<8x128xf32>
    %cst = arith.constant -1.000000e+30 : f32
    %10 = vector.shape_cast %3 : vector<1x128xi1> to vector<1x128xi1>
    %11 = vector.broadcast %10 : vector<1x128xi1> to vector<8x128xi1>
    %12 = vector.broadcast %cst : f32 to vector<8x128xf32>
    %13 = arith.select %11, %0, %12 : vector<8x128xi1>, vector<8x128xf32>
    %cst_5 = arith.constant dense<0xFF800000> : vector<8xf32>
    %14 = vector.multi_reduction <maximumf>, %13, %cst_5 [1] : vector<8x128xf32> to vector<8xf32>
    %15 = vector.shape_cast %14 : vector<8xf32> to vector<8x1xf32>
    %16 = vector.broadcast %15 : vector<8x1xf32> to vector<8x128xf32>
    %17 = arith.subf %13, %16 : vector<8x128xf32>
    %18 = math.exp %17 : vector<8x128xf32>
    %19 = arith.mulf %18, %9 : vector<8x128xf32>
    %cst_6 = arith.constant dense<0.000000e+00> : vector<8xf32>
    %20 = vector.multi_reduction <add>, %19, %cst_6 [1] : vector<8x128xf32> to vector<8xf32>
    %21 = vector.shape_cast %20 : vector<8xf32> to vector<8x1xf32>
    %22 = tpu.reciprocal %21 {approx = true} : vector<8x1xf32> -> vector<8x1xf32>
    %23 = arith.mulf %21, %22 : vector<8x1xf32>
    %cst_7 = arith.constant 2.000000e+00 : f32
    %24 = vector.broadcast %cst_7 : f32 to vector<8x1xf32>
    %25 = arith.subf %24, %23 : vector<8x1xf32>
    %26 = arith.mulf %22, %25 : vector<8x1xf32>
    %27 = vector.broadcast %26 : vector<8x1xf32> to vector<8x128xf32>
    %28 = arith.mulf %19, %27 : vector<8x128xf32>
    %c0_8 = arith.constant 0 : index
    %c0_9 = arith.constant 0 : index
    %29 = vector.load %arg4[%c0_8, %c0_9] : memref<8x128xf32, #tpu.memory_space<vmem>>, vector<8x128xf32>
    tpu.vector_store %arg4[%c0_8, %c0_9], %28 {strides = array<i32>} : memref<8x128xf32, #tpu.memory_space<vmem>>, vector<8x128xf32>,
    return
  }
  func.func @transform_0(%arg0: i32) -> (i32, i32) {
    %c0_i32 = arith.constant 0 : i32
    %c0_i32_0 = arith.constant 0 : i32
    return %arg0, %c0_i32 : i32, i32
  }
  func.func @transform_1(%arg0: i32) -> (i32, i32) {
    %c0_i32 = arith.constant 0 : i32
    %c0_i32_0 = arith.constant 0 : i32
    return %arg0, %c0_i32 : i32, i32
  }
  func.func @transform_2(%arg0: i32) -> (i32, i32) {
    %c0_i32 = arith.constant 0 : i32
    %c0_i32_0 = arith.constant 0 : i32
    %c0_i32_1 = arith.constant 0 : i32
    return %c0_i32, %c0_i32_0 : i32, i32
  }
  func.func @transform_3(%arg0: i32) -> (i32, i32) {
    %c0_i32 = arith.constant 0 : i32
    %c0_i32_0 = arith.constant 0 : i32
    return %arg0, %c0_i32 : i32, i32
  }
}

</mosaic_0001>

<llo_original>
// kernel: tpu_custom_call.1
$region0: #{tpu_custom_call.1}
  #allocation0 [shape = 'u32[]', space=smem, size = 0x4, offset = 0x4, fixed_abs, tag = 'smem constant byte address 0x4 - core index']
  #allocation1 [shape = 'u32[144,128]{1,0:T(1,128)}', space=vmem, size = 0x12000, scoped, tag = 'internal scratch']
  %s0 = inlined_call_operand.vmem [shape: f32[8,128], index: 0, kind: input, shape index: {}]
  %s1 = inlined_call_operand.vmem [shape: s32[8,1], index: 1, kind: input, shape index: {}]
  %s2 = inlined_call_operand.vmem [shape: s32[1,128], index: 2, kind: input, shape index: {}]
  %s3 = inlined_call_operand.hbm [shape: f32[8,128], index: 3, kind: output, shape index: {}]
  %s4 = sld [smem:[#allocation0]]
  $region22: #{tpu_custom_call.1} parent=0
    _
  %s6 = ssub.s32 1, %s4
  %s7 = scalar_select 0, %s6, %s4
  $region1: #{tpu_custom_call.1} parent=0
    #allocation2 [shape = 'u8[4096]{0}', space=vmem, size = 0x1000, scoped, tag = 'output window, operand 0, single buffered']
    #allocation3 [shape = 's32[1]{0}', space=sflag, size = 0x4, scoped, tag = 'scoped memory for tpu_custom_call.1']
    %8 = vsyncpa [#allocation3], 0
    // Predicated region
    $region2: #{tpu_custom_call.1} parent=1 // pred_check
      _
    $region3: #{tpu_custom_call.1} parent=1 // pred_check_branch
      %10 = sbr.rel (0) target = $region5
    $region4: #{tpu_custom_call.1} parent=1 // pred_region
      _
    $region5: #{tpu_custom_call.1} parent=1 // pred_fallthru
      _
    // Predicated region
    $region6: #{tpu_custom_call.1} parent=1 // pred_check
      _
    $region7: #{tpu_custom_call.1} parent=1 // pred_check_branch
      %12 = sbr.rel (0) target = $region9
    $region8: #{tpu_custom_call.1} parent=1 // pred_region
      _
    $region9: #{tpu_custom_call.1} parent=1 // pred_fallthru
      _
    // Predicated region
    $region10: #{tpu_custom_call.1} parent=1 // pred_check
      _
    $region11: #{tpu_custom_call.1} parent=1 // pred_check_branch
      %14 = sbr.rel (0) target = $region13
    $region12: #{tpu_custom_call.1} parent=1 // pred_region
      _
    $region13: #{tpu_custom_call.1} parent=1 // pred_fallthru
      _
    %v15 = vld [vmem:[%s0] sm:$0xff]
    %v16 = vld [vmem:[%s2] sm:$0x1]
    %vm17 = vcmp.ge.s32.totalorder %v16, 0
    %v18 = vld [vmem:[%s1] sm:$0xff]
    %19 = vset.pattern.permute.xlu0 0
    %20 = vperm.xlu0 %19, %v18
    %v21 = vpop.permute.xlu0 %20
    %v22 = vlaneseq
    %v23 = vshrl.u32 %v22, 7
    %v24 = vsub.s32 0, %v23
    %v25 = vrot.slane %v16, %v24
    %vm26 = vcmp.eq.s32.totalorder %v21, %v25
    %v27 = vsel %vm26, 1, 0
    %v28 = vcvt.s32.f32 %v27
    %v29 = vsel %vm17, 1, 0
    %v30 = vlaneseq
    %v31 = vshrl.u32 %v30, 7
    %v32 = vsub.s32 0, %v31
    %v33 = vrot.slane %v29, %v32
    %vm34 = vcmp.eq.s32.totalorder %v33, 1
    %v35 = vsel %vm34, %v15, -1e+30
    %36 = vmax.xlane.f32.xlu0 %v35
    %v37 = vpop.xlane.xlu0 %36
    %v38 = vsub.f32 %v35, %v37
    %v39 = vmul.f32 %v38, 1.442695
    %v40 = vpow.pop %v39
    %v41 = vmul.f32 %v40, %v28
    %42 = vadd.xlane.f32.xlu0 %v41
    %v43 = vpop.xlane.xlu0 %42
    %v44 = vrcp.pop %v43
    %v45 = vmul.f32 %v43, %v44
    %v46 = vsub.f32 2.0, %v45
    %v47 = vmul.f32 %v44, %v46
    %v48 = vmul.f32 %v41, %v47
    %49 = vst [vmem:[#allocation2] sm:$0xff] %v48
    // Predicated region
    $region14: #{tpu_custom_call.1} parent=1 // pred_check
      _
    $region15: #{tpu_custom_call.1} parent=1 // pred_check_branch
      %51 = sbr.rel (0) target = $region17
    $region16: #{tpu_custom_call.1} parent=1 // pred_region
      %s53 = ssub.s32 128, 128
      %54 = vsyncadd [#allocation3], %s53
      %s56 = sshll.u32 [#allocation2], 4
      %s57 = int_to_ptr.vmem [resolvable:$true] %s56
      %59 = dma.vmem_to_hbm [thread:$0]  %s57, 128, %s3, [#allocation3]
    $region17: #{tpu_custom_call.1} parent=1 // pred_fallthru
      _
    // Predicated region
    $region18: #{tpu_custom_call.1} parent=1 // pred_check
      _
    $region19: #{tpu_custom_call.1} parent=1 // pred_check_branch
      %61 = sbr.rel (0) target = $region21
    $region20: #{tpu_custom_call.1} parent=1 // pred_region
      %62 = dma.done [#allocation3], 128
    $region21: #{tpu_custom_call.1} parent=1 // pred_fallthru
      _
    %63 = vsyncpa [#allocation3], 1

</llo_original>
